<compile_context>
chip_gen: v5e
topology: v5e:2x2
jax: 0.10.0
libtpu: 0.0.40
codegen_flags: <defaults>
</compile_context>

<pallas_src>
import functools

import jax
import jax.numpy as jnp
from jax.experimental import pallas as pl
from jax.experimental.pallas import tpu as pltpu


def _round_up(n, m):
    return ((n + m - 1) // m) * m


def _nih_mlp_kernel(xT_ref, w1T_ref, b1_ref, w2T_ref, b2_ref, w3T_ref, b3_ref,
                    yT_ref):
    """One batch-tile of the NIH forward MLP, batch-on-lanes layout.

    xT : (D, TB)         w1T: (H, D)   b1: (H, 1)
                         w2T: (H, H)   b2: (H, 1)
                         w3T: (1, H)   b3: (1,)   [SMEM scalar]
    yT : (1, TB)
    """
    xT = xT_ref[...]
    h1 = jnp.tanh(
        jnp.dot(w1T_ref[...], xT, preferred_element_type=jnp.float32)
        + b1_ref[...])
    h2 = jnp.tanh(
        jnp.dot(w2T_ref[...], h1, preferred_element_type=jnp.float32)
        + b2_ref[...])
    y = (jnp.dot(w3T_ref[...], h2, preferred_element_type=jnp.float32)
         + b3_ref[0])
    yT_ref[...] = y.astype(yT_ref.dtype)


@functools.partial(jax.jit, static_argnames=("max_batch_tile",))
def nih_forward(x, params, *, max_batch_tile=512):
    """NIH.forward(x): returns y of shape [batch, 1]."""
    B, D = x.shape
    w1, b1, w2, b2, w3, b3 = (params["w1"], params["b1"], params["w2"],
                              params["b2"], params["w3"], params["b3"])
    H = w1.shape[1]

    # Batch-on-lanes layout: transpose inputs/weights in the wrapper (layout
    # plumbing only; XLA handles these tiny transposes outside the kernel).
    xT = x.T.astype(jnp.float32)          # (D, B)
    w1T = w1.T                            # (H, D)
    w2T = w2.T                            # (H, H)
    w3T = w3.T                            # (1, H)
    b1T = b1.reshape(H, 1)
    b2T = b2.reshape(H, 1)
    b3s = b3.reshape(1).astype(jnp.float32)

    # Batch tile: a multiple of 128 (full lane width), capped at max_batch_tile.
    tb = min(max_batch_tile, _round_up(B, 128))
    b_pad = _round_up(B, tb)
    if b_pad != B:
        # Zero-pad the batch (padded columns are discarded after the kernel).
        xT = jnp.pad(xT, ((0, 0), (0, b_pad - B)))

    grid = (b_pad // tb,)

    # Replicated (whole-array) operands: constant block index (0, 0) so they
    # stay resident in VMEM across grid steps.
    rep = lambda shape: pl.BlockSpec(shape, lambda i: (0, 0))

    yT = pl.pallas_call(
        _nih_mlp_kernel,
        out_shape=jax.ShapeDtypeStruct((1, b_pad), jnp.float32),
        grid_spec=pltpu.PrefetchScalarGridSpec(
            num_scalar_prefetch=0,
            grid=grid,
            in_specs=[
                pl.BlockSpec((D, tb), lambda i: (0, i)),            # xT
                rep((H, D)),                                        # w1T
                rep((H, 1)),                                        # b1
                rep((H, H)),                                        # w2T
                rep((H, 1)),                                        # b2
                rep((1, H)),                                        # w3T
                pl.BlockSpec(memory_space=pltpu.MemorySpace.SMEM),  # b3 scalar
            ],
            out_specs=pl.BlockSpec((1, tb), lambda i: (0, i)),      # yT, lane-dense
        ),
        compiler_params=pltpu.CompilerParams(
            dimension_semantics=("parallel",)),
    )(xT, w1T, b1T, w2T, b2T, w3T, b3s)

    # (1, B_pad) -> (B, 1), dropping the padded tail.
    return yT[0, :B].reshape(B, 1)


def permutation_tensor(n, assume_canonical_coords=True):
    """NIH._permutation_tensor, in plain JAX (used only by time_derivative)."""
    if assume_canonical_coords:
        M = jnp.eye(n, dtype=jnp.float32)
        M = jnp.concatenate([M[n // 2:], -M[:n // 2]], axis=0)
    else:
        M = jnp.ones((n, n), dtype=jnp.float32)
        M = M * (1.0 - jnp.eye(n, dtype=jnp.float32))
        M = M.at[::2].multiply(-1.0)
        M = M.at[:, ::2].multiply(-1.0)
        iu = jnp.triu(jnp.ones((n, n), dtype=bool), k=1)
        M = jnp.where(iu, -M, M)
    return M


def init_params(key, input_dim, hidden_dim):
    """Deterministic synthetic parameters (PyTorch-Linear-like uniform init)."""
    ks = jax.random.split(key, 6)

    def lin(kw, kb, fan_in, fan_out):
        bound = 1.0 / jnp.sqrt(fan_in)
        w = jax.random.uniform(kw, (fan_in, fan_out), jnp.float32,
                               minval=-bound, maxval=bound)
        b = jax.random.uniform(kb, (1, fan_out), jnp.float32,
                               minval=-bound, maxval=bound)
        return w, b

    w1, b1 = lin(ks[0], ks[1], input_dim, hidden_dim)
    w2, b2 = lin(ks[2], ks[3], hidden_dim, hidden_dim)
    w3, b3 = lin(ks[4], ks[5], hidden_dim, 1)
    return {"w1": w1, "b1": b1, "w2": w2, "b2": b2, "w3": w3, "b3": b3}


def reference_forward(x, p):
    """Pure-JAX reference of the same MLP, for correctness checking."""
    h1 = jnp.tanh(x @ p["w1"] + p["b1"])
    h2 = jnp.tanh(h1 @ p["w2"] + p["b2"])
    return h2 @ p["w3"] + p["b3"]


if __name__ == "__main__":
    # Small shapes consistent with a Hamiltonian system: input_dim=4
    # (2 generalized coords + 2 momenta), batch=8, hidden=32.
    B, D, H = 8, 4, 32

    key = jax.random.PRNGKey(0)
    kx, kp = jax.random.split(key)
    x = jax.random.normal(kx, (B, D), dtype=jnp.float32)
    params = init_params(kp, D, H)

    y = nih_forward(x, params)
    y = jax.block_until_ready(y)
    assert y.ndim == 2 and y.shape == (B, 1), y.shape

    # Correctness check against the pure-JAX reference.
    y_ref = reference_forward(x, params)
    assert jnp.allclose(y, y_ref, atol=1e-5, rtol=1e-5), \
        float(jnp.max(jnp.abs(y - y_ref)))

    # Permutation tensor (forward() does not use it; time_derivative does).
    M = permutation_tensor(D, assume_canonical_coords=True)
    jax.block_until_ready(M)
    # TODO(synk): time_derivative() uses torch.autograd.grad through the model;
    # an analytic/autodiff gradient path is not part of this forward kernel.

    print("KERNEL_OK")
</pallas_src>

<mosaic_0001>
module attributes {stable_mosaic.version = 11 : i64} {
  func.func @_nih_mlp_kernel(%arg0: i32, %arg1: memref<4x128xf32, #tpu.memory_space<vmem>>, %arg2: memref<32x4xf32, #tpu.memory_space<vmem>>, %arg3: memref<32x1xf32, #tpu.memory_space<vmem>>, %arg4: memref<32x32xf32, #tpu.memory_space<vmem>>, %arg5: memref<32x1xf32, #tpu.memory_space<vmem>>, %arg6: memref<1x32xf32, #tpu.memory_space<vmem>>, %arg7: memref<1xf32, #tpu.memory_space<smem>>, %arg8: memref<1x128xf32, #tpu.memory_space<vmem>>) attributes {dimension_semantics = [#tpu.dimension_semantics<parallel>], iteration_bounds = array<i64: 1>, scalar_prefetch = 0 : i64, scratch_operands = 0 : i64, tpu.core_type = #tpu.core_type<tc>, window_params = [{transform_indices = @transform_0, window_bounds = array<i64: 4, 128>}, {pipeline_mode = #tpu.pipeline_mode<synchronous>, transform_indices = @transform_1, window_bounds = array<i64: 32, 4>}, {pipeline_mode = #tpu.pipeline_mode<synchronous>, transform_indices = @transform_2, window_bounds = array<i64: 32, 1>}, {pipeline_mode = #tpu.pipeline_mode<synchronous>, transform_indices = @transform_3, window_bounds = array<i64: 32, 32>}, {pipeline_mode = #tpu.pipeline_mode<synchronous>, transform_indices = @transform_4, window_bounds = array<i64: 32, 1>}, {pipeline_mode = #tpu.pipeline_mode<synchronous>, transform_indices = @transform_5, window_bounds = array<i64: 1, 32>}, {transform_indices = @transform_6, window_bounds = array<i64: 1>}, {transform_indices = @transform_7, window_bounds = array<i64: 1, 128>}]} {
    %c0 = arith.constant 0 : index
    %c0_0 = arith.constant 0 : index
    %0 = vector.load %arg1[%c0, %c0_0] : memref<4x128xf32, #tpu.memory_space<vmem>>, vector<4x128xf32>
    %c0_1 = arith.constant 0 : index
    %c0_2 = arith.constant 0 : index
    %1 = vector.load %arg2[%c0_1, %c0_2] : memref<32x4xf32, #tpu.memory_space<vmem>>, vector<32x4xf32>
    %cst = arith.constant dense<0.000000e+00> : vector<32x128xf32>
    %2 = tpu.matmul %1, %0, %cst {dimension_numbers = #tpu.dot_dimension_numbers<[1], [0], [0], [1], [0, 0, 1, 1], [], []>} : vector<32x4xf32>, vector<4x128xf32>, vector<32x128xf32> -> vector<32x128xf32>
    %c0_3 = arith.constant 0 : index
    %c0_4 = arith.constant 0 : index
    %3 = vector.load %arg3[%c0_3, %c0_4] : memref<32x1xf32, #tpu.memory_space<vmem>>, vector<32x1xf32>
    %4 = vector.broadcast %3 : vector<32x1xf32> to vector<32x128xf32>
    %5 = arith.addf %2, %4 : vector<32x128xf32>
    %6 = math.tanh %5 : vector<32x128xf32>
    %c0_5 = arith.constant 0 : index
    %c0_6 = arith.constant 0 : index
    %7 = vector.load %arg4[%c0_5, %c0_6] : memref<32x32xf32, #tpu.memory_space<vmem>>, vector<32x32xf32>
    %cst_7 = arith.constant dense<0.000000e+00> : vector<32x128xf32>
    %8 = tpu.matmul %7, %6, %cst_7 {dimension_numbers = #tpu.dot_dimension_numbers<[1], [0], [0], [1], [0, 0, 1, 1], [], []>} : vector<32x32xf32>, vector<32x128xf32>, vector<32x128xf32> -> vector<32x128xf32>
    %c0_8 = arith.constant 0 : index
    %c0_9 = arith.constant 0 : index
    %9 = vector.load %arg5[%c0_8, %c0_9] : memref<32x1xf32, #tpu.memory_space<vmem>>, vector<32x1xf32>
    %10 = vector.broadcast %9 : vector<32x1xf32> to vector<32x128xf32>
    %11 = arith.addf %8, %10 : vector<32x128xf32>
    %12 = math.tanh %11 : vector<32x128xf32>
    %c0_10 = arith.constant 0 : index
    %c0_11 = arith.constant 0 : index
    %13 = vector.load %arg6[%c0_10, %c0_11] : memref<1x32xf32, #tpu.memory_space<vmem>>, vector<1x32xf32>
    %cst_12 = arith.constant dense<0.000000e+00> : vector<1x128xf32>
    %14 = tpu.matmul %13, %12, %cst_12 {dimension_numbers = #tpu.dot_dimension_numbers<[1], [0], [0], [1], [0, 0, 1, 1], [], []>} : vector<1x32xf32>, vector<32x128xf32>, vector<1x128xf32> -> vector<1x128xf32>
    %c0_13 = arith.constant 0 : index
    %15 = memref.load %arg7[%c0_13] : memref<1xf32, #tpu.memory_space<smem>>
    %16 = vector.broadcast %15 : f32 to vector<1x128xf32>
    %17 = arith.addf %14, %16 : vector<1x128xf32>
    %c0_14 = arith.constant 0 : index
    %c0_15 = arith.constant 0 : index
    %18 = vector.load %arg8[%c0_14, %c0_15] : memref<1x128xf32, #tpu.memory_space<vmem>>, vector<1x128xf32>
    tpu.vector_store %arg8[%c0_14, %c0_15], %17 {strides = array<i32>} : memref<1x128xf32, #tpu.memory_space<vmem>>, vector<1x128xf32>,
    return
  }
  func.func @transform_0(%arg0: i32) -> (i32, i32) {
    %c0_i32 = arith.constant 0 : i32
    %c0_i32_0 = arith.constant 0 : i32
    return %c0_i32, %arg0 : i32, i32
  }
  func.func @transform_1(%arg0: i32) -> (i32, i32) {
    %c0_i32 = arith.constant 0 : i32
    %c0_i32_0 = arith.constant 0 : i32
    %c0_i32_1 = arith.constant 0 : i32
    return %c0_i32, %c0_i32_0 : i32, i32
  }
  func.func @transform_2(%arg0: i32) -> (i32, i32) {
    %c0_i32 = arith.constant 0 : i32
    %c0_i32_0 = arith.constant 0 : i32
    %c0_i32_1 = arith.constant 0 : i32
    return %c0_i32, %c0_i32_0 : i32, i32
  }
  func.func @transform_3(%arg0: i32) -> (i32, i32) {
    %c0_i32 = arith.constant 0 : i32
    %c0_i32_0 = arith.constant 0 : i32
    %c0_i32_1 = arith.constant 0 : i32
    return %c0_i32, %c0_i32_0 : i32, i32
  }
  func.func @transform_4(%arg0: i32) -> (i32, i32) {
    %c0_i32 = arith.constant 0 : i32
    %c0_i32_0 = arith.constant 0 : i32
    %c0_i32_1 = arith.constant 0 : i32
    return %c0_i32, %c0_i32_0 : i32, i32
  }
  func.func @transform_5(%arg0: i32) -> (i32, i32) {
    %c0_i32 = arith.constant 0 : i32
    %c0_i32_0 = arith.constant 0 : i32
    %c0_i32_1 = arith.constant 0 : i32
    return %c0_i32, %c0_i32_0 : i32, i32
  }
  func.func @transform_6(%arg0: i32) -> i32 {
    %c0_i32 = arith.constant 0 : i32
    %c0_i32_0 = arith.constant 0 : i32
    return %c0_i32 : i32
  }
  func.func @transform_7(%arg0: i32) -> (i32, i32) {
    %c0_i32 = arith.constant 0 : i32
    %c0_i32_0 = arith.constant 0 : i32
    return %c0_i32, %arg0 : i32, i32
  }
}

</mosaic_0001>

<llo_original>
// kernel: nih_forward.1
$region0: #{nih_forward.1}
  #allocation0 [shape = 'u32[]', space=smem, size = 0x4, offset = 0x4, fixed_abs, tag = 'smem constant byte address 0x4 - core index']
  #allocation1 [shape = 'u32[72,128]{1,0:T(1,128)}', space=vmem, size = 0x9000, scoped, tag = 'internal scratch']
  #allocation2 [shape = 'f32[1]{0:T(128)S(6)}', space=smem, size = 0x200, scoped, tag = 'scoped memory for nih_forward.1']
  %s0 = inlined_call_operand.vmem [shape: f32[4,128], index: 0, kind: input, shape index: {}]
  %s1 = inlined_call_operand.vmem [shape: f32[32,4], index: 1, kind: input, shape index: {}]
  %s2 = inlined_call_operand.vmem [shape: f32[32,1], index: 2, kind: input, shape index: {}]
  %s3 = inlined_call_operand.vmem [shape: f32[32,32], index: 3, kind: input, shape index: {}]
  %s4 = inlined_call_operand.vmem [shape: f32[32,1], index: 4, kind: input, shape index: {}]
  %s5 = inlined_call_operand.vmem [shape: f32[1,32], index: 5, kind: input, shape index: {}]
  %s6 = inlined_call_operand.<no memory space> [shape: f32[1], index: 6, kind: input, shape index: {}]
  %s7 = inlined_call_operand.vmem [shape: f32[1,128], index: 7, kind: output, shape index: {}]
  %s8 = sld [smem:[#allocation0]]
  $region38: #{nih_forward.1} parent=0
    _
  %s10 = ssub.s32 1, %s8
  %s11 = scalar_select 0, %s10, %s8
  %12 = sst [smem:[#allocation2]] %s6
  // Predicated region
  $region2: #{nih_forward.1} parent=0 // pred_check
    _
  $region3: #{nih_forward.1} parent=0 // pred_check_branch
    %14 = sbr.rel (0) target = $region5
  $region4: #{nih_forward.1} parent=0 // pred_region
    _
  $region5: #{nih_forward.1} parent=0 // pred_fallthru
    _
  // Predicated region
  $region6: #{nih_forward.1} parent=0 // pred_check
    _
  $region7: #{nih_forward.1} parent=0 // pred_check_branch
    %16 = sbr.rel (0) target = $region9
  $region8: #{nih_forward.1} parent=0 // pred_region
    _
  $region9: #{nih_forward.1} parent=0 // pred_fallthru
    _
  // Predicated region
  $region10: #{nih_forward.1} parent=0 // pred_check
    _
  $region11: #{nih_forward.1} parent=0 // pred_check_branch
    %18 = sbr.rel (0) target = $region13
  $region12: #{nih_forward.1} parent=0 // pred_region
    _
  $region13: #{nih_forward.1} parent=0 // pred_fallthru
    _
  // Predicated region
  $region14: #{nih_forward.1} parent=0 // pred_check
    _
  $region15: #{nih_forward.1} parent=0 // pred_check_branch
    %20 = sbr.rel (0) target = $region17
  $region16: #{nih_forward.1} parent=0 // pred_region
    _
  $region17: #{nih_forward.1} parent=0 // pred_fallthru
    _
  // Predicated region
  $region18: #{nih_forward.1} parent=0 // pred_check
    _
  $region19: #{nih_forward.1} parent=0 // pred_check_branch
    %22 = sbr.rel (0) target = $region21
  $region20: #{nih_forward.1} parent=0 // pred_region
    _
  $region21: #{nih_forward.1} parent=0 // pred_fallthru
    _
  // Predicated region
  $region22: #{nih_forward.1} parent=0 // pred_check
    _
  $region23: #{nih_forward.1} parent=0 // pred_check_branch
    %24 = sbr.rel (0) target = $region25
  $region24: #{nih_forward.1} parent=0 // pred_region
    _
  $region25: #{nih_forward.1} parent=0 // pred_fallthru
    _
  // Predicated region
  $region26: #{nih_forward.1} parent=0 // pred_check
    _
  $region27: #{nih_forward.1} parent=0 // pred_check_branch
    %26 = sbr.rel (0) target = $region29
  $region28: #{nih_forward.1} parent=0 // pred_region
    _
  $region29: #{nih_forward.1} parent=0 // pred_fallthru
    _
  %v27 = vld [vmem:[%s0] sm:$0xf]
  %v28 = vld [vmem:[%s1] sm:$0xff]
  %v29 = vld [vmem:[%s1 + $0x8] sm:$0xff]
  %v30 = vld [vmem:[%s1 + $0x10] sm:$0xff]
  %v31 = vld [vmem:[%s1 + $0x18] sm:$0xff]
  %v32 = vld [vmem:[%s2] sm:$0xff]
  %v33 = vld [vmem:[%s2 + $0x8] sm:$0xff]
  %v34 = vld [vmem:[%s2 + $0x10] sm:$0xff]
  %v35 = vld [vmem:[%s2 + $0x18] sm:$0xff]
  %37 = vset.pattern.permute.xlu0 0
  %38 = vperm.xlu0 %37, %v32
  %v39 = vpop.permute.xlu0 %38
  %42 = vset.pattern.permute.xlu0 0
  %43 = vperm.xlu0 %42, %v33
  %v44 = vpop.permute.xlu0 %43
  %47 = vset.pattern.permute.xlu0 0
  %48 = vperm.xlu0 %47, %v34
  %v49 = vpop.permute.xlu0 %48
  %52 = vset.pattern.permute.xlu0 0
  %53 = vperm.xlu0 %52, %v35
  %v54 = vpop.permute.xlu0 %53
  %vm56 = vcmask 31744
  %v58 = vsel %vm56, %v28, 0
  %v61 = vsel %vm56, %v29, 0
  %v64 = vsel %vm56, %v30, 0
  %v67 = vsel %vm56, %v31, 0
  %vm69 = vcmask 1043456
  %v71 = vsel %vm69, %v27, 0
  %73 = vmatpush.msra.mxu0 0.0
  %74 = vmatpush.msra.mxu0 0.0
  %75 = vmatpush.msra.mxu0 0.0
  %76 = vmatpush.msra.mxu0 0.0
  %77 = vmatpush.msra.mxu0 0.0
  %78 = vmatpush.msra.mxu0 0.0
  %79 = vmatpush.msra.mxu0 0.0
  %80 = vmatpush.msra.mxu0 0.0
  %81 = vmatpush.msra.mxu0 0.0
  %82 = vmatpush.msra.mxu0 0.0
  %83 = vmatpush.msra.mxu0 0.0
  %84 = vmatpush.msra.mxu0 0.0
  %85 = vmatpush.msra.mxu0 0.0
  %86 = vmatpush.msra.mxu0 0.0
  %87 = vmatpush.msra.mxu0 0.0
  %88 = vmatpush.msra.mxu0 %v71
  %89 = vmatmul.f32.gmra.mxu0 %v58
  %v90 = vpop.f32.mrf.mxu0
  %v91 = vadd.f32 %v39, %v90
  %92 = vmatmul.f32.gmra.mxu0 %v61
  %v93 = vpop.f32.mrf.mxu0
  %v94 = vadd.f32 %v44, %v93
  %95 = vmatmul.f32.gmra.mxu0 %v64
  %v96 = vpop.f32.mrf.mxu0
  %v97 = vadd.f32 %v49, %v96
  %98 = vmatmul.f32.gmra.mxu0 %v67
  %v99 = vpop.f32.mrf.mxu0
  %v100 = vadd.f32 %v54, %v99
  %101 = vdwg.mxu0
  %v102 = vtanh.pop %v91
  %v103 = vtanh.pop %v94
  %v104 = vtanh.pop %v97
  %v105 = vtanh.pop %v100
  %v106 = vld [vmem:[%s3] sm:$0xff]
  %v107 = vld [vmem:[%s3 + $0x8] sm:$0xff]
  %v108 = vld [vmem:[%s3 + $0x10] sm:$0xff]
  %v109 = vld [vmem:[%s3 + $0x18] sm:$0xff]
  %v110 = vld [vmem:[%s4] sm:$0xff]
  %v111 = vld [vmem:[%s4 + $0x8] sm:$0xff]
  %v112 = vld [vmem:[%s4 + $0x10] sm:$0xff]
  %v113 = vld [vmem:[%s4 + $0x18] sm:$0xff]
  %115 = vset.pattern.permute.xlu0 0
  %116 = vperm.xlu0 %115, %v110
  %v117 = vpop.permute.xlu0 %116
  %120 = vset.pattern.permute.xlu0 0
  %121 = vperm.xlu0 %120, %v111
  %v122 = vpop.permute.xlu0 %121
  %125 = vset.pattern.permute.xlu0 0
  %126 = vperm.xlu0 %125, %v112
  %v127 = vpop.permute.xlu0 %126
  %130 = vset.pattern.permute.xlu0 0
  %131 = vperm.xlu0 %130, %v113
  %v132 = vpop.permute.xlu0 %131
  %vm134 = vcmask 261120
  %v136 = vsel %vm134, %v106, 0
  %v139 = vsel %vm134, %v107, 0
  %v142 = vsel %vm134, %v108, 0
  %v145 = vsel %vm134, %v109, 0
  %147 = vmatpush.msra.mxu0 0.0
  %148 = vmatpush.msra.mxu0 0.0
  %149 = vmatpush.msra.mxu0 0.0
  %150 = vmatpush.msra.mxu0 0.0
  %151 = vmatpush.msra.mxu0 0.0
  %152 = vmatpush.msra.mxu0 0.0
  %153 = vmatpush.msra.mxu0 0.0
  %154 = vmatpush.msra.mxu0 0.0
  %155 = vmatpush.msra.mxu0 0.0
  %156 = vmatpush.msra.mxu0 0.0
  %157 = vmatpush.msra.mxu0 0.0
  %158 = vmatpush.msra.mxu0 0.0
  %159 = vmatpush.msra.mxu0 %v105
  %160 = vmatpush.msra.mxu0 %v104
  %161 = vmatpush.msra.mxu0 %v103
  %162 = vmatpush.msra.mxu0 %v102
  %163 = vmatmul.f32.gmra.mxu0 %v136
  %v164 = vpop.f32.mrf.mxu0
  %v165 = vadd.f32 %v117, %v164
  %166 = vmatmul.f32.gmra.mxu0 %v139
  %v167 = vpop.f32.mrf.mxu0
  %v168 = vadd.f32 %v122, %v167
  %169 = vmatmul.f32.gmra.mxu0 %v142
  %v170 = vpop.f32.mrf.mxu0
  %v171 = vadd.f32 %v127, %v170
  %172 = vmatmul.f32.gmra.mxu0 %v145
  %v173 = vpop.f32.mrf.mxu0
  %v174 = vadd.f32 %v132, %v173
  %175 = vdwg.mxu0
  %v176 = vtanh.pop %v165
  %v177 = vtanh.pop %v168
  %v178 = vtanh.pop %v171
  %v179 = vtanh.pop %v174
  %v180 = vld [vmem:[%s5] sm:$0x1]
  %s181 = sld [smem:[#allocation2]]
  %v182 = vstv %s181
  %v184 = vsel %vm134, %v180, 0
  %186 = vmatpush.msra.mxu0 0.0
  %187 = vmatpush.msra.mxu0 0.0
  %188 = vmatpush.msra.mxu0 0.0
  %189 = vmatpush.msra.mxu0 0.0
  %190 = vmatpush.msra.mxu0 0.0
  %191 = vmatpush.msra.mxu0 0.0
  %192 = vmatpush.msra.mxu0 0.0
  %193 = vmatpush.msra.mxu0 0.0
  %194 = vmatpush.msra.mxu0 0.0
  %195 = vmatpush.msra.mxu0 0.0
  %196 = vmatpush.msra.mxu0 0.0
  %197 = vmatpush.msra.mxu0 0.0
  %198 = vmatpush.msra.mxu0 %v179
  %199 = vmatpush.msra.mxu0 %v178
  %200 = vmatpush.msra.mxu0 %v177
  %201 = vmatpush.msra.mxu0 %v176
  %202 = vmatmul.f32.gmra.mxu0 %v184
  %v203 = vpop.f32.mrf.mxu0
  %v204 = vadd.f32 %v182, %v203
  %205 = vdwg.mxu0
  %206 = vst [vmem:[%s7] sm:$0x1] %v204
  // Predicated region
  $region30: #{nih_forward.1} parent=0 // pred_check
    _
  $region31: #{nih_forward.1} parent=0 // pred_check_branch
    %208 = sbr.rel (0) target = $region33
  $region32: #{nih_forward.1} parent=0 // pred_region
    _
  $region33: #{nih_forward.1} parent=0 // pred_fallthru
    _
  // Predicated region
  $region34: #{nih_forward.1} parent=0 // pred_check
    _
  $region35: #{nih_forward.1} parent=0 // pred_check_branch
    %210 = sbr.rel (0) target = $region37
  $region36: #{nih_forward.1} parent=0 // pred_region
    _
  $region37: #{nih_forward.1} parent=0 // pred_fallthru
    _

</llo_original>
